<compile_context>
chip_gen: v5e
topology: v5e:2x2
jax: 0.10.0
libtpu: 0.0.40
codegen_flags: <defaults>
</compile_context>

<pallas_src>
import functools

import jax
import jax.numpy as jnp
from jax import lax
from jax.experimental import pallas as pl
from jax.experimental.pallas import tpu as pltpu


# splitmix32-style mixing constants, pre-wrapped into int32 range.
_MIX_M1 = 0x7FEB352D
_MIX_M2 = 0x846CA68B - (1 << 32)
_SEED_MUL = 0x9E3779B9 - (1 << 32)


def _mix32(h):
    """Integer avalanche hash (splitmix32 finalizer) on int32 lanes."""
    h = h ^ lax.shift_right_logical(h, 16)
    h = h * jnp.int32(_MIX_M1)
    h = h ^ lax.shift_right_logical(h, 15)
    h = h * jnp.int32(_MIX_M2)
    h = h ^ lax.shift_right_logical(h, 16)
    return h


def _pe_dropout_kernel(seed_ref, x_ref, pe_ref, o_ref, *,
                       total_cols, drop_threshold, inv_keep, apply_dropout):
    """seed_ref: SMEM (1,) int32 (scalar prefetch).
    x_ref/o_ref: (tile_rows, tile_cols) tile of the flattened (B, S*E) array.
    pe_ref: (1, tile_cols) tile of the flattened positional table (broadcast over rows).
    """
    y = x_ref[...] + pe_ref[...]                       # compute in the input dtype

    if apply_dropout:
        t_rows, t_cols = x_ref.shape
        c_blk = pl.program_id(0)                       # column-tile index (outer)
        r_blk = pl.program_id(1)                       # row-tile index (inner)
        row = lax.broadcasted_iota(jnp.int32, (t_rows, t_cols), 0) + r_blk * t_rows
        col = lax.broadcasted_iota(jnp.int32, (t_rows, t_cols), 1) + c_blk * t_cols
        # Unique per-element counter (independent of the tiling), mixed with the seed.
        ctr = row * total_cols + col
        h = _mix32(ctr + seed_ref[0] * jnp.int32(_SEED_MUL))
        u31 = h & jnp.int32(0x7FFFFFFF)                # uniform over [0, 2^31)
        keep = u31 >= jnp.int32(drop_threshold)        # P(drop) == dropout_rate
        y = jnp.where(keep, y * inv_keep, 0.0)         # inverted dropout

    o_ref[...] = y.astype(o_ref.dtype)


def _largest_divisor(n, limit, multiple):
    """Largest divisor of n that is <= limit and a multiple of `multiple` (or None)."""
    limit = min(limit, n)
    for cand in range(limit, 0, -1):
        if n % cand == 0 and cand % multiple == 0:
            return cand
    return None


def learned_positional_encoding(token_embedding, pos_table, *,
                                dropout_rate=0.1, training=False, seed=0):
    """token_embedding: (B, S, E); pos_table: (maxlen, E).  Returns (B, S, E)."""
    B, S, E = token_embedding.shape
    dtype = token_embedding.dtype

    # positions = arange(S) -> the embedding lookup is just the first S rows (glue).
    pe = lax.dynamic_slice_in_dim(pos_table, 0, S, axis=0)            # (S, E)

    # Flatten so the kernel's last dim is lane-dense (S*E instead of small E).
    C = S * E
    x2d = token_embedding.reshape(B, C)
    pe2d = pe.reshape(1, C).astype(dtype)

    # Tile sizing: lane dim a multiple of 128 (or full dim), ~<=2 MiB per x tile so
    # double-buffered x/out tiles fit comfortably in v7x's scoped VMEM.
    tile_cols = _largest_divisor(C, 8192, 128) or C
    bytes_per_row = tile_cols * jnp.dtype(dtype).itemsize
    row_budget = max(1, (2 << 20) // bytes_per_row)
    if B <= row_budget:
        tile_rows = B
    else:
        tile_rows = _largest_divisor(B, row_budget, 8) or B

    # Columns outer, rows (batch) inner: the PE block index is constant across the
    # inner loop, so Pallas skips re-issuing its DMA per batch step.
    grid = (C // tile_cols, B // tile_rows)

    apply_dropout = bool(training) and float(dropout_rate) > 0.0
    keep_prob = 1.0 - float(dropout_rate)
    drop_threshold = min(int(round(float(dropout_rate) * (1 << 31))), (1 << 31) - 1)
    inv_keep = (1.0 / keep_prob) if keep_prob > 0.0 else 0.0

    kernel = functools.partial(
        _pe_dropout_kernel,
        total_cols=C, drop_threshold=drop_threshold,
        inv_keep=inv_keep, apply_dropout=apply_dropout)

    out2d = pl.pallas_call(
        kernel,
        out_shape=jax.ShapeDtypeStruct((B, C), dtype),
        grid_spec=pltpu.PrefetchScalarGridSpec(
            num_scalar_prefetch=1,            # seed -> SMEM
            grid=grid,
            in_specs=[
                pl.BlockSpec((tile_rows, tile_cols), lambda c, r, seed: (r, c)),
                pl.BlockSpec((1, tile_cols), lambda c, r, seed: (0, c)),
            ],
            out_specs=pl.BlockSpec((tile_rows, tile_cols), lambda c, r, seed: (r, c)),
        ),
        compiler_params=pltpu.CompilerParams(
            dimension_semantics=("parallel", "parallel")),
    )(jnp.asarray([seed], dtype=jnp.int32), x2d, pe2d)

    return out2d.reshape(B, S, E)


if __name__ == "__main__":
    B, S, E, MAXLEN = 2, 8, 32, 64
    DROPOUT = 0.1

    key = jax.random.PRNGKey(0)
    k_x, k_w = jax.random.split(key)
    token_embedding = jax.random.normal(k_x, (B, S, E), dtype=jnp.float32)
    # nn.Embedding default init: N(0, 1)
    pos_table = jax.random.normal(k_w, (MAXLEN, E), dtype=jnp.float32)

    # Eval-mode forward (dropout is identity): must match x + pe exactly.
    out_eval = learned_positional_encoding(
        token_embedding, pos_table, dropout_rate=DROPOUT, training=False)
    jax.block_until_ready(out_eval)
    ref = token_embedding + pos_table[:S][None, :, :]
    assert jnp.allclose(out_eval, ref, atol=1e-6), "eval-mode mismatch"

    # Training-mode forward (in-kernel inverted dropout).
    # TODO(synk): dropout RNG stream is a counter-hash, not torch's RNG -> not
    # bit-comparable to nn.Dropout in training mode (same distribution/scaling).
    out_train = learned_positional_encoding(
        token_embedding, pos_table, dropout_rate=DROPOUT, training=True, seed=1234)
    jax.block_until_ready(out_train)

    kept = ref / (1.0 - DROPOUT)
    ok = jnp.isclose(out_train, kept, rtol=1e-5, atol=1e-5) | (out_train == 0.0)
    assert bool(jnp.all(ok)), "training-mode values must be 0 or (x+pe)/keep_prob"
    drop_frac = float(jnp.mean((out_train == 0.0).astype(jnp.float32)))
    assert drop_frac < 0.5, f"dropout dropped too many elements: {drop_frac}"

    print("KERNEL_OK")
</pallas_src>

<mosaic_0001>
module attributes {stable_mosaic.version = 11 : i64} {
  func.func @_pe_dropout_kernel(%arg0: i32, %arg1: i32, %arg2: memref<1xi32, #tpu.memory_space<smem>>, %arg3: memref<2x256xf32, #tpu.memory_space<vmem>>, %arg4: memref<1x256xf32, #tpu.memory_space<vmem>>, %arg5: memref<2x256xf32, #tpu.memory_space<vmem>>) attributes {dimension_semantics = [#tpu.dimension_semantics<parallel>, #tpu.dimension_semantics<parallel>], iteration_bounds = array<i64: 1, 1>, scalar_prefetch = 1 : i64, scratch_operands = 0 : i64, tpu.core_type = #tpu.core_type<tc>, window_params = [{transform_indices = @transform_0, window_bounds = array<i64: 2, 256>}, {transform_indices = @transform_1, window_bounds = array<i64: 1, 256>}, {transform_indices = @transform_2, window_bounds = array<i64: 2, 256>}]} {
    %c0 = arith.constant 0 : index
    %c0_0 = arith.constant 0 : index
    %0 = vector.load %arg3[%c0, %c0_0] : memref<2x256xf32, #tpu.memory_space<vmem>>, vector<2x256xf32>
    %c0_1 = arith.constant 0 : index
    %c0_2 = arith.constant 0 : index
    %1 = vector.load %arg4[%c0_1, %c0_2] : memref<1x256xf32, #tpu.memory_space<vmem>>, vector<1x256xf32>
    %2 = vector.broadcast %1 : vector<1x256xf32> to vector<2x256xf32>
    %3 = arith.addf %0, %2 : vector<2x256xf32>
    %c0_3 = arith.constant 0 : index
    %c0_4 = arith.constant 0 : index
    %4 = vector.load %arg5[%c0_3, %c0_4] : memref<2x256xf32, #tpu.memory_space<vmem>>, vector<2x256xf32>
    tpu.vector_store %arg5[%c0_3, %c0_4], %3 {strides = array<i32>} : memref<2x256xf32, #tpu.memory_space<vmem>>, vector<2x256xf32>,
    return
  }
  func.func @transform_0(%arg0: i32, %arg1: i32, %arg2: memref<1xi32, #tpu.memory_space<smem>>) -> (i32, i32) {
    %c0_i32 = arith.constant 0 : i32
    return %arg1, %arg0 : i32, i32
  }
  func.func @transform_1(%arg0: i32, %arg1: i32, %arg2: memref<1xi32, #tpu.memory_space<smem>>) -> (i32, i32) {
    %c0_i32 = arith.constant 0 : i32
    %c0_i32_0 = arith.constant 0 : i32
    return %c0_i32, %arg0 : i32, i32
  }
  func.func @transform_2(%arg0: i32, %arg1: i32, %arg2: memref<1xi32, #tpu.memory_space<smem>>) -> (i32, i32) {
    %c0_i32 = arith.constant 0 : i32
    return %arg1, %arg0 : i32, i32
  }
}

</mosaic_0001>

<llo_original>
// kernel: tpu_custom_call.1
$region0: #{tpu_custom_call.1}
  #allocation0 [shape = 'u32[]', space=smem, size = 0x4, offset = 0x4, fixed_abs, tag = 'smem constant byte address 0x4 - core index']
  #allocation1 [shape = 'u32[72,128]{1,0:T(1,128)}', space=vmem, size = 0x9000, scoped, tag = 'internal scratch']
  #allocation2 [shape = 's32[1]{0}', space=sflag, size = 0x4, scoped, tag = 'scoped memory for tpu_custom_call.1']
  #allocation3 [shape = 's32[1]{0:T(128)S(6)}', space=smem, size = 0x200, scoped, tag = 'prefetched SMEM operand 0']
  %s0 = inlined_call_operand.<no memory space> [shape: s32[1], index: 0, kind: input, shape index: {}]
  %s1 = inlined_call_operand.hbm [shape: f32[2,256], index: 1, kind: input, shape index: {}]
  %s2 = inlined_call_operand.vmem [shape: f32[1,256], index: 2, kind: input, shape index: {}]
  %s3 = inlined_call_operand.hbm [shape: f32[2,256], index: 3, kind: output, shape index: {}]
  %s4 = sld [smem:[#allocation0]]
  $region22: #{tpu_custom_call.1} parent=0
    _
  %s6 = ssub.s32 1, %s4
  %s7 = scalar_select 0, %s6, %s4
  %8 = sst [smem:[#allocation3]] %s0
  $region1: #{tpu_custom_call.1} parent=0
    #allocation4 [shape = 'u8[2048]{0}', space=vmem, size = 0x800, scoped, tag = 'input window, operand 1, single buffered']
    #allocation5 [shape = 's32[1]{0}', space=sflag, size = 0x4, scoped, tag = 'scoped memory for tpu_custom_call.1']
    #allocation6 [shape = 's32[1]{0}', space=sflag, size = 0x4, scoped, tag = 'scoped memory for tpu_custom_call.1']
    #allocation7 [shape = 'u8[2048]{0}', space=vmem, size = 0x800, scoped, tag = 'output window, operand 0, single buffered']
    %9 = vsyncpa [#allocation5], 0
    %10 = vsyncpa [#allocation6], 0
    // Predicated region
    $region2: #{tpu_custom_call.1} parent=1 // pred_check
      _
    $region3: #{tpu_custom_call.1} parent=1 // pred_check_branch
      %12 = sbr.rel (0) target = $region5
    $region4: #{tpu_custom_call.1} parent=1 // pred_region
      %14 = vsyncadd [#allocation5], 0
      %s16 = sshll.u32 %s1, 4
      %s17 = int_to_ptr.hbm [resolvable:$true] %s16
      %s18 = sshll.u32 [#allocation4], 4
      %s19 = int_to_ptr.vmem [resolvable:$true] %s18
      %21 = dma.hbm_to_vmem [thread:$0]  %s17, 64, %s19, [#allocation5]
    $region5: #{tpu_custom_call.1} parent=1 // pred_fallthru
      _
    // Predicated region
    $region6: #{tpu_custom_call.1} parent=1 // pred_check
      _
    $region7: #{tpu_custom_call.1} parent=1 // pred_check_branch
      %23 = sbr.rel (0) target = $region9
    $region8: #{tpu_custom_call.1} parent=1 // pred_region
      _
    $region9: #{tpu_custom_call.1} parent=1 // pred_fallthru
      _
    // Predicated region
    $region10: #{tpu_custom_call.1} parent=1 // pred_check
      _
    $region11: #{tpu_custom_call.1} parent=1 // pred_check_branch
      %25 = sbr.rel (0) target = $region13
    $region12: #{tpu_custom_call.1} parent=1 // pred_region
      %27 = dma.done [#allocation5], 64
    $region13: #{tpu_custom_call.1} parent=1 // pred_fallthru
      _
    %v28 = vld [vmem:[#allocation4] sm:$0xf]
    %v29 = vld [vmem:[%s2] sm:$0x3]
    %v31 = vperm.slane %v29, 0
    %v32 = vperm.slane %v29, 1
    %v33 = vrot.slane %v32, 6
    %vm34 = vcmask 1041408
    %v35 = vsel %vm34, %v31, %v33
    %v37 = vadd.f32 %v28, %v35
    %38 = vst [vmem:[#allocation7] sm:$0xf] %v37
    // Predicated region
    $region14: #{tpu_custom_call.1} parent=1 // pred_check
      _
    $region15: #{tpu_custom_call.1} parent=1 // pred_check_branch
      %40 = sbr.rel (0) target = $region17
    $region16: #{tpu_custom_call.1} parent=1 // pred_region
      %42 = vsyncadd [#allocation6], 0
      %s44 = sshll.u32 [#allocation7], 4
      %s45 = int_to_ptr.vmem [resolvable:$true] %s44
      %s46 = sshll.u32 %s3, 4
      %s47 = int_to_ptr.hbm [resolvable:$true] %s46
      %49 = dma.vmem_to_hbm [thread:$0]  %s45, 64, %s47, [#allocation6]
    $region17: #{tpu_custom_call.1} parent=1 // pred_fallthru
      _
    // Predicated region
    $region18: #{tpu_custom_call.1} parent=1 // pred_check
      _
    $region19: #{tpu_custom_call.1} parent=1 // pred_check_branch
      %51 = sbr.rel (0) target = $region21
    $region20: #{tpu_custom_call.1} parent=1 // pred_region
      %53 = dma.done [#allocation6], 64
    $region21: #{tpu_custom_call.1} parent=1 // pred_fallthru
      _
    %54 = vsyncpa [#allocation5], 1
    %55 = vsyncpa [#allocation6], 1

</llo_original>
